<compile_context>
chip_gen: v6e
topology: v6e:2x2x1
jax: 0.10.0
libtpu: 0.0.40
codegen_flags: <defaults>
</compile_context>

<pallas_src>
import jax
import jax.numpy as jnp
from jax.experimental import pallas as pl
from jax.experimental.pallas import tpu as pltpu

D_IN, D_H1, D_H2, D_OUT = 4, 48, 64, 2


def qnet_kernel(x_ref, w1_ref, b1_ref, w2_ref, b2_ref, w3_ref, b3_ref, o_ref):
    x = x_ref[...]                                   # [4, TB]   (batch on lanes)
    w1 = w1_ref[...]                                 # [48, 4]

    # fc1: K=4 contraction -> 4 unrolled VPU broadcast multiply-adds (MXU <4% used).
    acc1 = w1[:, 0:1] * x[0:1, :]                    # [48, TB]
    for k in range(1, D_IN):
        acc1 = acc1 + w1[:, k:k + 1] * x[k:k + 1, :]
    h1 = jnp.maximum(acc1 + b1_ref[...], 0.0)        # [48, TB]

    # fc2: 64x48 — the only layer worth sending to the MXU.
    h2 = jnp.dot(w2_ref[...], h1, preferred_element_type=jnp.float32)
    h2 = jnp.maximum(h2 + b2_ref[...], 0.0)          # [64, TB]

    # fc_out: only 2 output rows -> VPU multiply + sublane (XLU) reduction per row.
    w3 = w3_ref[...]                                 # [64, 2] (stored [in, out])
    b3 = b3_ref[...]                                 # [2, 1]
    o0 = jnp.sum(w3[:, 0:1] * h2, axis=0, keepdims=True)   # [1, TB]
    o1 = jnp.sum(w3[:, 1:2] * h2, axis=0, keepdims=True)   # [1, TB]
    o_ref[0:1, :] = (o0 + b3[0:1, :]).astype(o_ref.dtype)  # lane-dense row stores
    o_ref[1:2, :] = (o1 + b3[1:2, :]).astype(o_ref.dtype)


def qnetwork_forward(x, params, *, tb=512):
    """x: [B, 4] float32 -> [B, 2] float32 (same math as the PyTorch QNetwork)."""
    w1, b1, w2, b2, w3, b3 = params
    B = x.shape[0]

    # Batch tile: multiple of 128 lanes, capped at `tb`; pad batch to a tile multiple.
    b_pad128 = ((B + 127) // 128) * 128
    tb = min(tb, b_pad128)
    b_pad = ((B + tb - 1) // tb) * tb
    grid = (b_pad // tb,)

    # Layout plumbing: pad batch and move it to the lane (last) axis.
    x_t = jnp.pad(x.astype(jnp.float32), ((0, b_pad - B), (0, 0))).T   # [4, B_pad]

    weight_bytes = 4 * (w1.size + b1.size + w2.size + b2.size + w3.size + b3.size)
    cost = pl.CostEstimate(
        flops=2 * b_pad * (D_IN * D_H1 + D_H1 * D_H2 + D_H2 * D_OUT),
        transcendentals=0,
        bytes_accessed=4 * b_pad * (D_IN + D_OUT) + weight_bytes,
    )

    const = lambda i: (0, 0)   # weights/biases stay resident in VMEM across steps
    out_t = pl.pallas_call(
        qnet_kernel,
        out_shape=jax.ShapeDtypeStruct((D_OUT, b_pad), jnp.float32),
        grid=grid,
        in_specs=[
            pl.BlockSpec((D_IN, tb), lambda i: (0, i)),   # x tile   [4, TB]
            pl.BlockSpec((D_H1, D_IN), const),            # w1       [48, 4]
            pl.BlockSpec((D_H1, 1), const),               # b1       [48, 1]
            pl.BlockSpec((D_H2, D_H1), const),            # w2       [64, 48]
            pl.BlockSpec((D_H2, 1), const),               # b2       [64, 1]
            pl.BlockSpec((D_H2, D_OUT), const),           # w3       [64, 2]
            pl.BlockSpec((D_OUT, 1), const),              # b3       [2, 1]
        ],
        out_specs=pl.BlockSpec((D_OUT, tb), lambda i: (0, i)),
        compiler_params=pltpu.CompilerParams(
            dimension_semantics=("parallel",),            # v7x: both TensorCores
            vmem_limit_bytes=32 * 1024 * 1024,
        ),
        cost_estimate=cost,
    )(x_t, w1, b1, w2, b2, w3, b3)

    return out_t.T[:B]                                    # back to [B, 2]


def init_params(key):
    # Mimic PyTorch nn.Linear default init: U(-1/sqrt(fan_in), 1/sqrt(fan_in)).
    k1w, k1b, k2w, k2b, k3w, k3b = jax.random.split(key, 6)

    def bnd(fan_in):
        return 1.0 / jnp.sqrt(jnp.float32(fan_in))

    w1 = jax.random.uniform(k1w, (D_H1, D_IN), jnp.float32, -bnd(D_IN), bnd(D_IN))
    b1 = jax.random.uniform(k1b, (D_H1, 1), jnp.float32, -bnd(D_IN), bnd(D_IN))
    w2 = jax.random.uniform(k2w, (D_H2, D_H1), jnp.float32, -bnd(D_H1), bnd(D_H1))
    b2 = jax.random.uniform(k2b, (D_H2, 1), jnp.float32, -bnd(D_H1), bnd(D_H1))
    # fc_out weight stored transposed as [in, out] so the kernel slices columns.
    w3 = jax.random.uniform(k3w, (D_H2, D_OUT), jnp.float32, -bnd(D_H2), bnd(D_H2))
    b3 = jax.random.uniform(k3b, (D_OUT, 1), jnp.float32, -bnd(D_H2), bnd(D_H2))
    return (w1, b1, w2, b2, w3, b3)


def reference_forward(x, params):
    w1, b1, w2, b2, w3, b3 = params
    h1 = jnp.maximum(x @ w1.T + b1.T, 0.0)
    h2 = jnp.maximum(h1 @ w2.T + b2.T, 0.0)
    return h2 @ w3 + b3.T


if __name__ == "__main__":
    key = jax.random.PRNGKey(0)
    k_params, k_x1, k_x2 = jax.random.split(key, 3)
    params = init_params(k_params)

    # Small RL-style batch (single grid step, tile padded up to 128 lanes).
    x_small = jax.random.normal(k_x1, (8, D_IN), jnp.float32)
    out_small = jax.block_until_ready(qnetwork_forward(x_small, params))
    ref_small = reference_forward(x_small, params)
    assert out_small.shape == (8, D_OUT)
    assert jnp.allclose(out_small, ref_small, atol=1e-5, rtol=1e-4)

    # Larger, non-tile-multiple batch exercises the multi-step grid + padding path.
    x_big = jax.random.normal(k_x2, (1000, D_IN), jnp.float32)
    out_big = jax.block_until_ready(qnetwork_forward(x_big, params))
    ref_big = reference_forward(x_big, params)
    assert out_big.shape == (1000, D_OUT)
    assert jnp.allclose(out_big, ref_big, atol=1e-5, rtol=1e-4)

    print("KERNEL_OK")
</pallas_src>

<mosaic_0001>
module attributes {stable_mosaic.version = 11 : i64} {
  func.func @qnet_kernel(%arg0: i32, %arg1: memref<4x128xf32, #tpu.memory_space<vmem>>, %arg2: memref<48x4xf32, #tpu.memory_space<vmem>>, %arg3: memref<48x1xf32, #tpu.memory_space<vmem>>, %arg4: memref<64x48xf32, #tpu.memory_space<vmem>>, %arg5: memref<64x1xf32, #tpu.memory_space<vmem>>, %arg6: memref<64x2xf32, #tpu.memory_space<vmem>>, %arg7: memref<2x1xf32, #tpu.memory_space<vmem>>, %arg8: memref<2x128xf32, #tpu.memory_space<vmem>>) attributes {dimension_semantics = [#tpu.dimension_semantics<parallel>], iteration_bounds = array<i64: 1>, scalar_prefetch = 0 : i64, scratch_operands = 0 : i64, tpu.core_type = #tpu.core_type<tc>, window_params = [{transform_indices = @transform_0, window_bounds = array<i64: 4, 128>}, {pipeline_mode = #tpu.pipeline_mode<synchronous>, transform_indices = @transform_1, window_bounds = array<i64: 48, 4>}, {pipeline_mode = #tpu.pipeline_mode<synchronous>, transform_indices = @transform_2, window_bounds = array<i64: 48, 1>}, {pipeline_mode = #tpu.pipeline_mode<synchronous>, transform_indices = @transform_3, window_bounds = array<i64: 64, 48>}, {pipeline_mode = #tpu.pipeline_mode<synchronous>, transform_indices = @transform_4, window_bounds = array<i64: 64, 1>}, {pipeline_mode = #tpu.pipeline_mode<synchronous>, transform_indices = @transform_5, window_bounds = array<i64: 64, 2>}, {pipeline_mode = #tpu.pipeline_mode<synchronous>, transform_indices = @transform_6, window_bounds = array<i64: 2, 1>}, {transform_indices = @transform_7, window_bounds = array<i64: 2, 128>}]} {
    %c0 = arith.constant 0 : index
    %c0_0 = arith.constant 0 : index
    %0 = vector.load %arg1[%c0, %c0_0] : memref<4x128xf32, #tpu.memory_space<vmem>>, vector<4x128xf32>
    %c0_1 = arith.constant 0 : index
    %c0_2 = arith.constant 0 : index
    %1 = vector.load %arg2[%c0_1, %c0_2] : memref<48x4xf32, #tpu.memory_space<vmem>>, vector<48x4xf32>
    %2 = vector.extract_strided_slice %1 {offsets = [0, 0], sizes = [48, 1], strides = [1, 1]} : vector<48x4xf32> to vector<48x1xf32>
    %3 = vector.extract_strided_slice %0 {offsets = [0, 0], sizes = [1, 128], strides = [1, 1]} : vector<4x128xf32> to vector<1x128xf32>
    %4 = vector.broadcast %2 : vector<48x1xf32> to vector<48x128xf32>
    %5 = vector.broadcast %3 : vector<1x128xf32> to vector<48x128xf32>
    %6 = arith.mulf %4, %5 : vector<48x128xf32>
    %7 = vector.extract_strided_slice %1 {offsets = [0, 1], sizes = [48, 1], strides = [1, 1]} : vector<48x4xf32> to vector<48x1xf32>
    %8 = vector.extract_strided_slice %0 {offsets = [1, 0], sizes = [1, 128], strides = [1, 1]} : vector<4x128xf32> to vector<1x128xf32>
    %9 = vector.broadcast %7 : vector<48x1xf32> to vector<48x128xf32>
    %10 = vector.broadcast %8 : vector<1x128xf32> to vector<48x128xf32>
    %11 = arith.mulf %9, %10 : vector<48x128xf32>
    %12 = arith.addf %6, %11 : vector<48x128xf32>
    %13 = vector.extract_strided_slice %1 {offsets = [0, 2], sizes = [48, 1], strides = [1, 1]} : vector<48x4xf32> to vector<48x1xf32>
    %14 = vector.extract_strided_slice %0 {offsets = [2, 0], sizes = [1, 128], strides = [1, 1]} : vector<4x128xf32> to vector<1x128xf32>
    %15 = vector.broadcast %13 : vector<48x1xf32> to vector<48x128xf32>
    %16 = vector.broadcast %14 : vector<1x128xf32> to vector<48x128xf32>
    %17 = arith.mulf %15, %16 : vector<48x128xf32>
    %18 = arith.addf %12, %17 : vector<48x128xf32>
    %19 = vector.extract_strided_slice %1 {offsets = [0, 3], sizes = [48, 1], strides = [1, 1]} : vector<48x4xf32> to vector<48x1xf32>
    %20 = vector.extract_strided_slice %0 {offsets = [3, 0], sizes = [1, 128], strides = [1, 1]} : vector<4x128xf32> to vector<1x128xf32>
    %21 = vector.broadcast %19 : vector<48x1xf32> to vector<48x128xf32>
    %22 = vector.broadcast %20 : vector<1x128xf32> to vector<48x128xf32>
    %23 = arith.mulf %21, %22 : vector<48x128xf32>
    %24 = arith.addf %18, %23 : vector<48x128xf32>
    %c0_3 = arith.constant 0 : index
    %c0_4 = arith.constant 0 : index
    %25 = vector.load %arg3[%c0_3, %c0_4] : memref<48x1xf32, #tpu.memory_space<vmem>>, vector<48x1xf32>
    %26 = vector.broadcast %25 : vector<48x1xf32> to vector<48x128xf32>
    %27 = arith.addf %24, %26 : vector<48x128xf32>
    %cst = arith.constant 0.000000e+00 : f32
    %28 = vector.broadcast %cst : f32 to vector<48x128xf32>
    %29 = arith.maximumf %27, %28 : vector<48x128xf32>
    %c0_5 = arith.constant 0 : index
    %c0_6 = arith.constant 0 : index
    %30 = vector.load %arg4[%c0_5, %c0_6] : memref<64x48xf32, #tpu.memory_space<vmem>>, vector<64x48xf32>
    %cst_7 = arith.constant dense<0.000000e+00> : vector<64x128xf32>
    %31 = tpu.matmul %30, %29, %cst_7 {dimension_numbers = #tpu.dot_dimension_numbers<[1], [0], [0], [1], [0, 0, 1, 1], [], []>} : vector<64x48xf32>, vector<48x128xf32>, vector<64x128xf32> -> vector<64x128xf32>
    %c0_8 = arith.constant 0 : index
    %c0_9 = arith.constant 0 : index
    %32 = vector.load %arg5[%c0_8, %c0_9] : memref<64x1xf32, #tpu.memory_space<vmem>>, vector<64x1xf32>
    %33 = vector.broadcast %32 : vector<64x1xf32> to vector<64x128xf32>
    %34 = arith.addf %31, %33 : vector<64x128xf32>
    %cst_10 = arith.constant 0.000000e+00 : f32
    %35 = vector.broadcast %cst_10 : f32 to vector<64x128xf32>
    %36 = arith.maximumf %34, %35 : vector<64x128xf32>
    %c0_11 = arith.constant 0 : index
    %c0_12 = arith.constant 0 : index
    %37 = vector.load %arg6[%c0_11, %c0_12] : memref<64x2xf32, #tpu.memory_space<vmem>>, vector<64x2xf32>
    %c0_13 = arith.constant 0 : index
    %c0_14 = arith.constant 0 : index
    %38 = vector.load %arg7[%c0_13, %c0_14] : memref<2x1xf32, #tpu.memory_space<vmem>>, vector<2x1xf32>
    %39 = vector.extract_strided_slice %37 {offsets = [0, 0], sizes = [64, 1], strides = [1, 1]} : vector<64x2xf32> to vector<64x1xf32>
    %40 = vector.broadcast %39 : vector<64x1xf32> to vector<64x128xf32>
    %41 = arith.mulf %40, %36 : vector<64x128xf32>
    %cst_15 = arith.constant dense<0.000000e+00> : vector<128xf32>
    %42 = vector.multi_reduction <add>, %41, %cst_15 [0] : vector<64x128xf32> to vector<128xf32>
    %43 = vector.shape_cast %42 : vector<128xf32> to vector<1x128xf32>
    %44 = vector.extract_strided_slice %37 {offsets = [0, 1], sizes = [64, 1], strides = [1, 1]} : vector<64x2xf32> to vector<64x1xf32>
    %45 = vector.broadcast %44 : vector<64x1xf32> to vector<64x128xf32>
    %46 = arith.mulf %45, %36 : vector<64x128xf32>
    %cst_16 = arith.constant dense<0.000000e+00> : vector<128xf32>
    %47 = vector.multi_reduction <add>, %46, %cst_16 [0] : vector<64x128xf32> to vector<128xf32>
    %48 = vector.shape_cast %47 : vector<128xf32> to vector<1x128xf32>
    %49 = vector.extract_strided_slice %38 {offsets = [0, 0], sizes = [1, 1], strides = [1, 1]} : vector<2x1xf32> to vector<1x1xf32>
    %50 = vector.broadcast %49 : vector<1x1xf32> to vector<1x128xf32>
    %51 = arith.addf %43, %50 : vector<1x128xf32>
    %c0_17 = arith.constant 0 : index
    %c0_18 = arith.constant 0 : index
    %52 = vector.load %arg8[%c0_17, %c0_18] : memref<2x128xf32, #tpu.memory_space<vmem>>, vector<1x128xf32>
    tpu.vector_store %arg8[%c0_17, %c0_18], %51 {strides = array<i32>} : memref<2x128xf32, #tpu.memory_space<vmem>>, vector<1x128xf32>,
    %53 = vector.extract_strided_slice %38 {offsets = [1, 0], sizes = [1, 1], strides = [1, 1]} : vector<2x1xf32> to vector<1x1xf32>
    %54 = vector.broadcast %53 : vector<1x1xf32> to vector<1x128xf32>
    %55 = arith.addf %48, %54 : vector<1x128xf32>
    %c1 = arith.constant 1 : index
    %c0_19 = arith.constant 0 : index
    %56 = vector.load %arg8[%c1, %c0_19] : memref<2x128xf32, #tpu.memory_space<vmem>>, vector<1x128xf32>
    tpu.vector_store %arg8[%c1, %c0_19], %55 {strides = array<i32>} : memref<2x128xf32, #tpu.memory_space<vmem>>, vector<1x128xf32>,
    return
  }
  func.func @transform_0(%arg0: i32) -> (i32, i32) {
    %c0_i32 = arith.constant 0 : i32
    %c0_i32_0 = arith.constant 0 : i32
    return %c0_i32, %arg0 : i32, i32
  }
  func.func @transform_1(%arg0: i32) -> (i32, i32) {
    %c0_i32 = arith.constant 0 : i32
    %c0_i32_0 = arith.constant 0 : i32
    %c0_i32_1 = arith.constant 0 : i32
    return %c0_i32, %c0_i32_0 : i32, i32
  }
  func.func @transform_2(%arg0: i32) -> (i32, i32) {
    %c0_i32 = arith.constant 0 : i32
    %c0_i32_0 = arith.constant 0 : i32
    %c0_i32_1 = arith.constant 0 : i32
    return %c0_i32, %c0_i32_0 : i32, i32
  }
  func.func @transform_3(%arg0: i32) -> (i32, i32) {
    %c0_i32 = arith.constant 0 : i32
    %c0_i32_0 = arith.constant 0 : i32
    %c0_i32_1 = arith.constant 0 : i32
    return %c0_i32, %c0_i32_0 : i32, i32
  }
  func.func @transform_4(%arg0: i32) -> (i32, i32) {
    %c0_i32 = arith.constant 0 : i32
    %c0_i32_0 = arith.constant 0 : i32
    %c0_i32_1 = arith.constant 0 : i32
    return %c0_i32, %c0_i32_0 : i32, i32
  }
  func.func @transform_5(%arg0: i32) -> (i32, i32) {
    %c0_i32 = arith.constant 0 : i32
    %c0_i32_0 = arith.constant 0 : i32
    %c0_i32_1 = arith.constant 0 : i32
    return %c0_i32, %c0_i32_0 : i32, i32
  }
  func.func @transform_6(%arg0: i32) -> (i32, i32) {
    %c0_i32 = arith.constant 0 : i32
    %c0_i32_0 = arith.constant 0 : i32
    %c0_i32_1 = arith.constant 0 : i32
    return %c0_i32, %c0_i32_0 : i32, i32
  }
  func.func @transform_7(%arg0: i32) -> (i32, i32) {
    %c0_i32 = arith.constant 0 : i32
    %c0_i32_0 = arith.constant 0 : i32
    return %c0_i32, %arg0 : i32, i32
  }
}

</mosaic_0001>

<llo_original>
// kernel: tpu_custom_call.1
$region0: #{tpu_custom_call.1}
  #allocation0 [shape = 'u32[]', space=smem, size = 0x4, offset = 0x4, fixed_abs, tag = 'smem constant byte address 0x4 - core index']
  #allocation1 [shape = 'u32[144,128]{1,0:T(1,128)}', space=vmem, size = 0x12000, scoped, tag = 'internal scratch']
  %s0 = inlined_call_operand.vmem [shape: f32[4,128], index: 0, kind: input, shape index: {}]
  %s1 = inlined_call_operand.vmem [shape: f32[48,4], index: 1, kind: input, shape index: {}]
  %s2 = inlined_call_operand.vmem [shape: f32[48,1], index: 2, kind: input, shape index: {}]
  %s3 = inlined_call_operand.vmem [shape: f32[64,48], index: 3, kind: input, shape index: {}]
  %s4 = inlined_call_operand.vmem [shape: f32[64,1], index: 4, kind: input, shape index: {}]
  %s5 = inlined_call_operand.vmem [shape: f32[64,2], index: 5, kind: input, shape index: {}]
  %s6 = inlined_call_operand.vmem [shape: f32[2,1], index: 6, kind: input, shape index: {}]
  %s7 = inlined_call_operand.hbm [shape: f32[2,128], index: 7, kind: output, shape index: {}]
  %s8 = sld [smem:[#allocation0]]
  $region38: #{tpu_custom_call.1} parent=0
    _
  %s10 = ssub.s32 1, %s8
  %s11 = scalar_select 0, %s10, %s8
  $region1: #{tpu_custom_call.1} parent=0
    #allocation2 [shape = 'u8[1024]{0}', space=vmem, size = 0x400, scoped, tag = 'output window, operand 0, single buffered']
    #allocation3 [shape = 's32[1]{0}', space=sflag, size = 0x4, scoped, tag = 'scoped memory for tpu_custom_call.1']
    %12 = vsyncpa [#allocation3], 0
    // Predicated region
    $region2: #{tpu_custom_call.1} parent=1 // pred_check
      _
    $region3: #{tpu_custom_call.1} parent=1 // pred_check_branch
      %14 = sbr.rel (0) target = $region5
    $region4: #{tpu_custom_call.1} parent=1 // pred_region
      _
    $region5: #{tpu_custom_call.1} parent=1 // pred_fallthru
      _
    // Predicated region
    $region6: #{tpu_custom_call.1} parent=1 // pred_check
      _
    $region7: #{tpu_custom_call.1} parent=1 // pred_check_branch
      %16 = sbr.rel (0) target = $region9
    $region8: #{tpu_custom_call.1} parent=1 // pred_region
      _
    $region9: #{tpu_custom_call.1} parent=1 // pred_fallthru
      _
    // Predicated region
    $region10: #{tpu_custom_call.1} parent=1 // pred_check
      _
    $region11: #{tpu_custom_call.1} parent=1 // pred_check_branch
      %18 = sbr.rel (0) target = $region13
    $region12: #{tpu_custom_call.1} parent=1 // pred_region
      _
    $region13: #{tpu_custom_call.1} parent=1 // pred_fallthru
      _
    // Predicated region
    $region14: #{tpu_custom_call.1} parent=1 // pred_check
      _
    $region15: #{tpu_custom_call.1} parent=1 // pred_check_branch
      %20 = sbr.rel (0) target = $region17
    $region16: #{tpu_custom_call.1} parent=1 // pred_region
      _
    $region17: #{tpu_custom_call.1} parent=1 // pred_fallthru
      _
    // Predicated region
    $region18: #{tpu_custom_call.1} parent=1 // pred_check
      _
    $region19: #{tpu_custom_call.1} parent=1 // pred_check_branch
      %22 = sbr.rel (0) target = $region21
    $region20: #{tpu_custom_call.1} parent=1 // pred_region
      _
    $region21: #{tpu_custom_call.1} parent=1 // pred_fallthru
      _
    // Predicated region
    $region22: #{tpu_custom_call.1} parent=1 // pred_check
      _
    $region23: #{tpu_custom_call.1} parent=1 // pred_check_branch
      %24 = sbr.rel (0) target = $region25
    $region24: #{tpu_custom_call.1} parent=1 // pred_region
      _
    $region25: #{tpu_custom_call.1} parent=1 // pred_fallthru
      _
    // Predicated region
    $region26: #{tpu_custom_call.1} parent=1 // pred_check
      _
    $region27: #{tpu_custom_call.1} parent=1 // pred_check_branch
      %26 = sbr.rel (0) target = $region29
    $region28: #{tpu_custom_call.1} parent=1 // pred_region
      _
    $region29: #{tpu_custom_call.1} parent=1 // pred_fallthru
      _
    %v27 = vld [vmem:[%s0] sm:$0xf]
    %v28 = vld [vmem:[%s1] sm:$0xff]
    %v29 = vld [vmem:[%s1 + $0x8] sm:$0xff]
    %v30 = vld [vmem:[%s1 + $0x10] sm:$0xff]
    %v31 = vld [vmem:[%s1 + $0x18] sm:$0xff]
    %v32 = vld [vmem:[%s1 + $0x20] sm:$0xff]
    %v33 = vld [vmem:[%s1 + $0x28] sm:$0xff]
    %35 = vset.pattern.permute.xlu0 0
    %36 = vperm.xlu0 %35, %v28
    %v37 = vpop.permute.xlu0 %36
    %40 = vset.pattern.permute.xlu0 0
    %41 = vperm.xlu0 %40, %v29
    %v42 = vpop.permute.xlu0 %41
    %45 = vset.pattern.permute.xlu0 0
    %46 = vperm.xlu0 %45, %v30
    %v47 = vpop.permute.xlu0 %46
    %50 = vset.pattern.permute.xlu0 0
    %51 = vperm.xlu0 %50, %v31
    %v52 = vpop.permute.xlu0 %51
    %55 = vset.pattern.permute.xlu0 0
    %56 = vperm.xlu0 %55, %v32
    %v57 = vpop.permute.xlu0 %56
    %60 = vset.pattern.permute.xlu0 0
    %61 = vperm.xlu0 %60, %v33
    %v62 = vpop.permute.xlu0 %61
    %v64 = vlaneseq
    %v65 = vshrl.u32 %v64, 7
    %v66 = vsub.s32 0, %v65
    %v67 = vrot.slane %v27, %v66
    %v68 = vmul.f32 %v37, %v67
    %v69 = vmul.f32 %v42, %v67
    %v70 = vmul.f32 %v47, %v67
    %v71 = vmul.f32 %v52, %v67
    %v72 = vmul.f32 %v57, %v67
    %v73 = vmul.f32 %v62, %v67
    %74 = vset.pattern.permute.xlu0 1
    %75 = vperm.xlu0 %74, %v28
    %v76 = vpop.permute.xlu0 %75
    %78 = vset.pattern.permute.xlu0 1
    %79 = vperm.xlu0 %78, %v29
    %v80 = vpop.permute.xlu0 %79
    %82 = vset.pattern.permute.xlu0 1
    %83 = vperm.xlu0 %82, %v30
    %v84 = vpop.permute.xlu0 %83
    %86 = vset.pattern.permute.xlu0 1
    %87 = vperm.xlu0 %86, %v31
    %v88 = vpop.permute.xlu0 %87
    %90 = vset.pattern.permute.xlu0 1
    %91 = vperm.xlu0 %90, %v32
    %v92 = vpop.permute.xlu0 %91
    %94 = vset.pattern.permute.xlu0 1
    %95 = vperm.xlu0 %94, %v33
    %v96 = vpop.permute.xlu0 %95
    %v98 = vlaneseq
    %v99 = vshrl.u32 %v98, 7
    %v100 = vsub.s32 1, %v99
    %v101 = vrot.slane %v27, %v100
    %v102 = vmul.f32 %v76, %v101
    %v103 = vmul.f32 %v80, %v101
    %v104 = vmul.f32 %v84, %v101
    %v105 = vmul.f32 %v88, %v101
    %v106 = vmul.f32 %v92, %v101
    %v107 = vmul.f32 %v96, %v101
    %v108 = vadd.f32 %v68, %v102
    %v109 = vadd.f32 %v69, %v103
    %v110 = vadd.f32 %v70, %v104
    %v111 = vadd.f32 %v71, %v105
    %v112 = vadd.f32 %v72, %v106
    %v113 = vadd.f32 %v73, %v107
    %114 = vset.pattern.permute.xlu0 2
    %115 = vperm.xlu0 %114, %v28
    %v116 = vpop.permute.xlu0 %115
    %118 = vset.pattern.permute.xlu0 2
    %119 = vperm.xlu0 %118, %v29
    %v120 = vpop.permute.xlu0 %119
    %122 = vset.pattern.permute.xlu0 2
    %123 = vperm.xlu0 %122, %v30
    %v124 = vpop.permute.xlu0 %123
    %126 = vset.pattern.permute.xlu0 2
    %127 = vperm.xlu0 %126, %v31
    %v128 = vpop.permute.xlu0 %127
    %130 = vset.pattern.permute.xlu0 2
    %131 = vperm.xlu0 %130, %v32
    %v132 = vpop.permute.xlu0 %131
    %134 = vset.pattern.permute.xlu0 2
    %135 = vperm.xlu0 %134, %v33
    %v136 = vpop.permute.xlu0 %135
    %v138 = vlaneseq
    %v139 = vshrl.u32 %v138, 7
    %v140 = vsub.s32 2, %v139
    %v141 = vrot.slane %v27, %v140
    %v142 = vmul.f32 %v116, %v141
    %v143 = vmul.f32 %v120, %v141
    %v144 = vmul.f32 %v124, %v141
    %v145 = vmul.f32 %v128, %v141
    %v146 = vmul.f32 %v132, %v141
    %v147 = vmul.f32 %v136, %v141
    %v148 = vadd.f32 %v108, %v142
    %v149 = vadd.f32 %v109, %v143
    %v150 = vadd.f32 %v110, %v144
    %v151 = vadd.f32 %v111, %v145
    %v152 = vadd.f32 %v112, %v146
    %v153 = vadd.f32 %v113, %v147
    %154 = vset.pattern.permute.xlu0 3
    %155 = vperm.xlu0 %154, %v28
    %v156 = vpop.permute.xlu0 %155
    %158 = vset.pattern.permute.xlu0 3
    %159 = vperm.xlu0 %158, %v29
    %v160 = vpop.permute.xlu0 %159
    %162 = vset.pattern.permute.xlu0 3
    %163 = vperm.xlu0 %162, %v30
    %v164 = vpop.permute.xlu0 %163
    %166 = vset.pattern.permute.xlu0 3
    %167 = vperm.xlu0 %166, %v31
    %v168 = vpop.permute.xlu0 %167
    %170 = vset.pattern.permute.xlu0 3
    %171 = vperm.xlu0 %170, %v32
    %v172 = vpop.permute.xlu0 %171
    %174 = vset.pattern.permute.xlu0 3
    %175 = vperm.xlu0 %174, %v33
    %v176 = vpop.permute.xlu0 %175
    %v178 = vlaneseq
    %v179 = vshrl.u32 %v178, 7
    %v180 = vsub.s32 3, %v179
    %v181 = vrot.slane %v27, %v180
    %v182 = vmul.f32 %v156, %v181
    %v183 = vmul.f32 %v160, %v181
    %v184 = vmul.f32 %v164, %v181
    %v185 = vmul.f32 %v168, %v181
    %v186 = vmul.f32 %v172, %v181
    %v187 = vmul.f32 %v176, %v181
    %v188 = vadd.f32 %v148, %v182
    %v189 = vadd.f32 %v149, %v183
    %v190 = vadd.f32 %v150, %v184
    %v191 = vadd.f32 %v151, %v185
    %v192 = vadd.f32 %v152, %v186
    %v193 = vadd.f32 %v153, %v187
    %v194 = vld [vmem:[%s2] sm:$0xff]
    %v195 = vld [vmem:[%s2 + $0x8] sm:$0xff]
    %v196 = vld [vmem:[%s2 + $0x10] sm:$0xff]
    %v197 = vld [vmem:[%s2 + $0x18] sm:$0xff]
    %v198 = vld [vmem:[%s2 + $0x20] sm:$0xff]
    %v199 = vld [vmem:[%s2 + $0x28] sm:$0xff]
    %201 = vset.pattern.permute.xlu0 0
    %202 = vperm.xlu0 %201, %v194
    %v203 = vpop.permute.xlu0 %202
    %206 = vset.pattern.permute.xlu0 0
    %207 = vperm.xlu0 %206, %v195
    %v208 = vpop.permute.xlu0 %207
    %211 = vset.pattern.permute.xlu0 0
    %212 = vperm.xlu0 %211, %v196
    %v213 = vpop.permute.xlu0 %212
    %216 = vset.pattern.permute.xlu0 0
    %217 = vperm.xlu0 %216, %v197
    %v218 = vpop.permute.xlu0 %217
    %221 = vset.pattern.permute.xlu0 0
    %222 = vperm.xlu0 %221, %v198
    %v223 = vpop.permute.xlu0 %222
    %226 = vset.pattern.permute.xlu0 0
    %227 = vperm.xlu0 %226, %v199
    %v228 = vpop.permute.xlu0 %227
    %v230 = vadd.f32 %v188, %v203
    %v231 = vadd.f32 %v189, %v208
    %v232 = vadd.f32 %v190, %v213
    %v233 = vadd.f32 %v191, %v218
    %v234 = vadd.f32 %v192, %v223
    %v235 = vadd.f32 %v193, %v228
    %v236 = vmax.f32 %v230, 0.0
    %v237 = vmax.f32 %v231, 0.0
    %v238 = vmax.f32 %v232, 0.0
    %v239 = vmax.f32 %v233, 0.0
    %v240 = vmax.f32 %v234, 0.0
    %v241 = vmax.f32 %v235, 0.0
    %v242 = vld [vmem:[%s3] sm:$0xff]
    %v243 = vld [vmem:[%s3 + $0x8] sm:$0xff]
    %v244 = vld [vmem:[%s3 + $0x10] sm:$0xff]
    %v245 = vld [vmem:[%s3 + $0x18] sm:$0xff]
    %v246 = vld [vmem:[%s3 + $0x20] sm:$0xff]
    %v247 = vld [vmem:[%s3 + $0x28] sm:$0xff]
    %v248 = vld [vmem:[%s3 + $0x30] sm:$0xff]
    %v249 = vld [vmem:[%s3 + $0x38] sm:$0xff]
    %v250 = vld [vmem:[%s4] sm:$0xff]
    %v251 = vld [vmem:[%s4 + $0x8] sm:$0xff]
    %v252 = vld [vmem:[%s4 + $0x10] sm:$0xff]
    %v253 = vld [vmem:[%s4 + $0x18] sm:$0xff]
    %v254 = vld [vmem:[%s4 + $0x20] sm:$0xff]
    %v255 = vld [vmem:[%s4 + $0x28] sm:$0xff]
    %v256 = vld [vmem:[%s4 + $0x30] sm:$0xff]
    %v257 = vld [vmem:[%s4 + $0x38] sm:$0xff]
    %259 = vset.pattern.permute.xlu0 0
    %260 = vperm.xlu0 %259, %v250
    %v261 = vpop.permute.xlu0 %260
    %264 = vset.pattern.permute.xlu0 0
    %265 = vperm.xlu0 %264, %v251
    %v266 = vpop.permute.xlu0 %265
    %269 = vset.pattern.permute.xlu0 0
    %270 = vperm.xlu0 %269, %v252
    %v271 = vpop.permute.xlu0 %270
    %274 = vset.pattern.permute.xlu0 0
    %275 = vperm.xlu0 %274, %v253
    %v276 = vpop.permute.xlu0 %275
    %279 = vset.pattern.permute.xlu0 0
    %280 = vperm.xlu0 %279, %v254
    %v281 = vpop.permute.xlu0 %280
    %284 = vset.pattern.permute.xlu0 0
    %285 = vperm.xlu0 %284, %v255
    %v286 = vpop.permute.xlu0 %285
    %289 = vset.pattern.permute.xlu0 0
    %290 = vperm.xlu0 %289, %v256
    %v291 = vpop.permute.xlu0 %290
    %294 = vset.pattern.permute.xlu0 0
    %295 = vperm.xlu0 %294, %v257
    %v296 = vpop.permute.xlu0 %295
    %vm298 = vcmask 392192
    %v300 = vsel %vm298, %v242, 0
    %v303 = vsel %vm298, %v243, 0
    %v306 = vsel %vm298, %v244, 0
    %v309 = vsel %vm298, %v245, 0
    %v312 = vsel %vm298, %v246, 0
    %v315 = vsel %vm298, %v247, 0
    %v318 = vsel %vm298, %v248, 0
    %v321 = vsel %vm298, %v249, 0
    %323 = vmatprep.subr.mxu0 0.0
    %324 = vmatpush1.msra.mxu0 0.0
    %325 = vmatprep.subr.mxu0 0.0
    %326 = vmatpush1.msra.mxu0 0.0
    %327 = vmatprep.subr.mxu0 0.0
    %328 = vmatpush1.msra.mxu0 0.0
    %329 = vmatprep.subr.mxu0 0.0
    %330 = vmatpush1.msra.mxu0 0.0
    %331 = vmatprep.subr.mxu0 0.0
    %332 = vmatpush1.msra.mxu0 0.0
    %333 = vmatprep.subr.mxu0 0.0
    %334 = vmatpush1.msra.mxu0 0.0
    %335 = vmatprep.subr.mxu0 0.0
    %336 = vmatpush1.msra.mxu0 0.0
    %337 = vmatprep.subr.mxu0 0.0
    %338 = vmatpush1.msra.mxu0 0.0
    %339 = vmatprep.subr.mxu0 0.0
    %340 = vmatpush1.msra.mxu0 0.0
    %341 = vmatprep.subr.mxu0 0.0
    %342 = vmatpush1.msra.mxu0 0.0
    %343 = vmatprep.subr.mxu0 0.0
    %344 = vmatpush1.msra.mxu0 %v241
    %345 = vmatprep.subr.mxu0 0.0
    %346 = vmatpush1.msra.mxu0 %v240
    %347 = vmatprep.subr.mxu0 0.0
    %348 = vmatpush1.msra.mxu0 %v239
    %349 = vmatprep.subr.mxu0 0.0
    %350 = vmatpush1.msra.mxu0 %v238
    %351 = vmatprep.subr.mxu0 0.0
    %352 = vmatpush1.msra.mxu0 %v237
    %353 = vmatprep.subr.mxu0 0.0
    %354 = vmatpush1.msra.mxu0 %v236
    %355 = vmatprep.subr.mxu0 0.0
    %356 = vmatpush2.msra.mxu0 0.0
    %357 = vmatprep.subr.mxu0 0.0
    %358 = vmatpush2.msra.mxu0 0.0
    %359 = vmatprep.subr.mxu0 0.0
    %360 = vmatpush2.msra.mxu0 0.0
    %361 = vmatprep.subr.mxu0 0.0
    %362 = vmatpush2.msra.mxu0 0.0
    %363 = vmatprep.subr.mxu0 0.0
    %364 = vmatpush2.msra.mxu0 0.0
    %365 = vmatprep.subr.mxu0 0.0
    %366 = vmatpush2.msra.mxu0 0.0
    %367 = vmatprep.subr.mxu0 0.0
    %368 = vmatpush2.msra.mxu0 0.0
    %369 = vmatprep.subr.mxu0 0.0
    %370 = vmatpush2.msra.mxu0 0.0
    %371 = vmatprep.subr.mxu0 0.0
    %372 = vmatpush2.msra.mxu0 0.0
    %373 = vmatprep.subr.mxu0 0.0
    %374 = vmatpush2.msra.mxu0 0.0
    %375 = vmatprep.subr.mxu0 0.0
    %376 = vmatpush2.msra.mxu0 0.0
    %377 = vmatprep.subr.mxu0 0.0
    %378 = vmatpush2.msra.mxu0 0.0
    %379 = vmatprep.subr.mxu0 0.0
    %380 = vmatpush2.msra.mxu0 0.0
    %381 = vmatprep.subr.mxu0 0.0
    %382 = vmatpush2.msra.mxu0 0.0
    %383 = vmatprep.subr.mxu0 0.0
    %384 = vmatpush2.msra.mxu0 0.0
    %385 = vmatprep.subr.mxu0 0.0
    %386 = vmatpush2.msra.mxu0 0.0
    %387 = vmatprep.mubr.f32.mxu0 0.0
    %388 = vmatmul.mubr.f32.gmra.mxu0 %v300
    %v389 = vpop.f32.mrf.mxu0
    %v390 = vadd.f32 %v261, %v389
    %v391 = vpop.f32.mrf.mxu0
    %392 = vmatprep.mubr.f32.mxu0 0.0
    %393 = vmatmul.mubr.f32.gmra.mxu0 %v303
    %v394 = vpop.f32.mrf.mxu0
    %v395 = vadd.f32 %v266, %v394
    %v396 = vpop.f32.mrf.mxu0
    %397 = vmatprep.mubr.f32.mxu0 0.0
    %398 = vmatmul.mubr.f32.gmra.mxu0 %v306
    %v399 = vpop.f32.mrf.mxu0
    %v400 = vadd.f32 %v271, %v399
    %v401 = vpop.f32.mrf.mxu0
    %402 = vmatprep.mubr.f32.mxu0 0.0
    %403 = vmatmul.mubr.f32.gmra.mxu0 %v309
    %v404 = vpop.f32.mrf.mxu0
    %v405 = vadd.f32 %v276, %v404
    %v406 = vpop.f32.mrf.mxu0
    %407 = vmatprep.mubr.f32.mxu0 0.0
    %408 = vmatmul.mubr.f32.gmra.mxu0 %v312
    %v409 = vpop.f32.mrf.mxu0
    %v410 = vadd.f32 %v281, %v409
    %v411 = vpop.f32.mrf.mxu0
    %412 = vmatprep.mubr.f32.mxu0 0.0
    %413 = vmatmul.mubr.f32.gmra.mxu0 %v315
    %v414 = vpop.f32.mrf.mxu0
    %v415 = vadd.f32 %v286, %v414
    %v416 = vpop.f32.mrf.mxu0
    %417 = vmatprep.mubr.f32.mxu0 0.0
    %418 = vmatmul.mubr.f32.gmra.mxu0 %v318
    %v419 = vpop.f32.mrf.mxu0
    %v420 = vadd.f32 %v291, %v419
    %v421 = vpop.f32.mrf.mxu0
    %422 = vmatprep.mubr.f32.mxu0 0.0
    %423 = vmatmul.mubr.f32.gmra.mxu0 %v321
    %v424 = vpop.f32.mrf.mxu0
    %v425 = vadd.f32 %v296, %v424
    %v426 = vpop.f32.mrf.mxu0
    %427 = vdwg.mxu0
    %v428 = vmax.f32 %v390, 0.0
    %v429 = vmax.f32 %v395, 0.0
    %v430 = vmax.f32 %v400, 0.0
    %v431 = vmax.f32 %v405, 0.0
    %v432 = vmax.f32 %v410, 0.0
    %v433 = vmax.f32 %v415, 0.0
    %v434 = vmax.f32 %v420, 0.0
    %v435 = vmax.f32 %v425, 0.0
    %v436 = vld [vmem:[%s5] sm:$0xff]
    %v437 = vld [vmem:[%s5 + $0x8] sm:$0xff]
    %v438 = vld [vmem:[%s5 + $0x10] sm:$0xff]
    %v439 = vld [vmem:[%s5 + $0x18] sm:$0xff]
    %v440 = vld [vmem:[%s5 + $0x20] sm:$0xff]
    %v441 = vld [vmem:[%s5 + $0x28] sm:$0xff]
    %v442 = vld [vmem:[%s5 + $0x30] sm:$0xff]
    %v443 = vld [vmem:[%s5 + $0x38] sm:$0xff]
    %v444 = vld [vmem:[%s6] sm:$0x3]
    %446 = vset.pattern.permute.xlu0 0
    %447 = vperm.xlu0 %446, %v436
    %v448 = vpop.permute.xlu0 %447
    %451 = vset.pattern.permute.xlu0 0
    %452 = vperm.xlu0 %451, %v437
    %v453 = vpop.permute.xlu0 %452
    %456 = vset.pattern.permute.xlu0 0
    %457 = vperm.xlu0 %456, %v438
    %v458 = vpop.permute.xlu0 %457
    %461 = vset.pattern.permute.xlu0 0
    %462 = vperm.xlu0 %461, %v439
    %v463 = vpop.permute.xlu0 %462
    %466 = vset.pattern.permute.xlu0 0
    %467 = vperm.xlu0 %466, %v440
    %v468 = vpop.permute.xlu0 %467
    %471 = vset.pattern.permute.xlu0 0
    %472 = vperm.xlu0 %471, %v441
    %v473 = vpop.permute.xlu0 %472
    %476 = vset.pattern.permute.xlu0 0
    %477 = vperm.xlu0 %476, %v442
    %v478 = vpop.permute.xlu0 %477
    %481 = vset.pattern.permute.xlu0 0
    %482 = vperm.xlu0 %481, %v443
    %v483 = vpop.permute.xlu0 %482
    %v485 = vmul.f32 %v448, %v428
    %v486 = vmul.f32 %v453, %v429
    %v487 = vmul.f32 %v458, %v430
    %v488 = vmul.f32 %v463, %v431
    %v489 = vmul.f32 %v468, %v432
    %v490 = vmul.f32 %v473, %v433
    %v491 = vmul.f32 %v478, %v434
    %v492 = vmul.f32 %v483, %v435
    %v493 = vadd.f32 %v485, %v486
    %v494 = vadd.f32 %v493, %v487
    %v495 = vadd.f32 %v494, %v488
    %v496 = vadd.f32 %v495, %v489
    %v497 = vadd.f32 %v496, %v490
    %v498 = vadd.f32 %v497, %v491
    %v499 = vadd.f32 %v498, %v492
    %v500 = vrot.slane %v499, 4
    %v501 = vadd.f32 %v499, %v500
    %v502 = vrot.slane %v501, 2
    %v503 = vadd.f32 %v501, %v502
    %v504 = vrot.slane %v503, 1
    %v505 = vadd.f32 %v503, %v504
    %506 = vset.pattern.permute.xlu0 1
    %507 = vperm.xlu0 %506, %v436
    %v508 = vpop.permute.xlu0 %507
    %510 = vset.pattern.permute.xlu0 1
    %511 = vperm.xlu0 %510, %v437
    %v512 = vpop.permute.xlu0 %511
    %514 = vset.pattern.permute.xlu0 1
    %515 = vperm.xlu0 %514, %v438
    %v516 = vpop.permute.xlu0 %515
    %518 = vset.pattern.permute.xlu0 1
    %519 = vperm.xlu0 %518, %v439
    %v520 = vpop.permute.xlu0 %519
    %522 = vset.pattern.permute.xlu0 1
    %523 = vperm.xlu0 %522, %v440
    %v524 = vpop.permute.xlu0 %523
    %526 = vset.pattern.permute.xlu0 1
    %527 = vperm.xlu0 %526, %v441
    %v528 = vpop.permute.xlu0 %527
    %530 = vset.pattern.permute.xlu0 1
    %531 = vperm.xlu0 %530, %v442
    %v532 = vpop.permute.xlu0 %531
    %534 = vset.pattern.permute.xlu0 1
    %535 = vperm.xlu0 %534, %v443
    %v536 = vpop.permute.xlu0 %535
    %v538 = vmul.f32 %v508, %v428
    %v539 = vmul.f32 %v512, %v429
    %v540 = vmul.f32 %v516, %v430
    %v541 = vmul.f32 %v520, %v431
    %v542 = vmul.f32 %v524, %v432
    %v543 = vmul.f32 %v528, %v433
    %v544 = vmul.f32 %v532, %v434
    %v545 = vmul.f32 %v536, %v435
    %v546 = vadd.f32 %v538, %v539
    %v547 = vadd.f32 %v546, %v540
    %v548 = vadd.f32 %v547, %v541
    %v549 = vadd.f32 %v548, %v542
    %v550 = vadd.f32 %v549, %v543
    %v551 = vadd.f32 %v550, %v544
    %v552 = vadd.f32 %v551, %v545
    %v553 = vrot.slane %v552, 4
    %v554 = vadd.f32 %v552, %v553
    %v555 = vrot.slane %v554, 2
    %v556 = vadd.f32 %v554, %v555
    %v557 = vrot.slane %v556, 1
    %v558 = vadd.f32 %v556, %v557
    %560 = vset.pattern.permute.xlu0 0
    %561 = vperm.xlu0 %560, %v444
    %v562 = vpop.permute.xlu0 %561
    %v564 = vadd.f32 %v505, %v562
    %565 = vst [vmem:[#allocation2] sm:$0x1] %v564
    %v566 = vadd.f32 %v558, %v562
    %567 = vst [vmem:[#allocation2] sm:$0x2] %v566
    // Predicated region
    $region30: #{tpu_custom_call.1} parent=1 // pred_check
      _
    $region31: #{tpu_custom_call.1} parent=1 // pred_check_branch
      %569 = sbr.rel (0) target = $region33
    $region32: #{tpu_custom_call.1} parent=1 // pred_region
      %s571 = ssub.s32 32, 32
      %572 = vsyncadd [#allocation3], %s571
      %s574 = sshll.u32 [#allocation2], 4
      %s575 = int_to_ptr.vmem [resolvable:$true] %s574
      %577 = dma.vmem_to_hbm [thread:$0]  %s575, 32, %s7, [#allocation3]
    $region33: #{tpu_custom_call.1} parent=1 // pred_fallthru
      _
    // Predicated region
    $region34: #{tpu_custom_call.1} parent=1 // pred_check
      _
    $region35: #{tpu_custom_call.1} parent=1 // pred_check_branch
      %579 = sbr.rel (0) target = $region37
    $region36: #{tpu_custom_call.1} parent=1 // pred_region
      %580 = dma.done [#allocation3], 32
    $region37: #{tpu_custom_call.1} parent=1 // pred_fallthru
      _
    %581 = vsyncpa [#allocation3], 1

</llo_original>
